<compile_context>
chip_gen: v6e
topology: v6e:2x2x1
jax: 0.10.0
libtpu: 0.0.40
codegen_flags: <defaults>
</compile_context>

<pallas_src>
import functools

import jax
import jax.numpy as jnp
from jax import lax
from jax.experimental import pallas as pl
from jax.experimental.pallas import tpu as pltpu


def _pick_b_blk(B, T, max_rows=256):
    """Largest divisor of B such that B_blk*T rows fit a comfortable block."""
    best = 1
    for cand in range(1, B + 1):
        if B % cand:
            continue
        if cand * T > max_rows:
            break
        best = cand
    # Block's second-to-last dim must be a multiple of 8 or span the full array.
    if (best * T) % 8 != 0 and best != B:
        best = B
    return best


def _att_kernel(x_ref, w_ref, bias_ref, o_ref, *, d):
    # x_ref:    (N, C_in)        flattened rows of B_blk batches (N = B_blk*T)
    # w_ref:    (C_in, 2d+c_out) fused [Wq*scale | Wk | Wv]
    # bias_ref: (N, N)           0 where (same batch & causal), -1e9 elsewhere
    # o_ref:    (N, c_out)
    xb = x_ref[...].astype(jnp.bfloat16)
    wb = w_ref[...].astype(jnp.bfloat16)

    # Fused QKV projection — one wide MXU matmul, f32 accumulation.
    proj = jnp.dot(xb, wb, preferred_element_type=jnp.float32)   # (N, 2d+c_out)
    pb = proj.astype(jnp.bfloat16)
    q = pb[:, :d]            # 1/sqrt(d) already folded into the weights
    k = pb[:, d:2 * d]
    v = pb[:, 2 * d:]

    # scores = q @ k^T (contract last dims; no explicit transpose materialized)
    s = lax.dot_general(q, k, (((1,), (1,)), ((), ())),
                        preferred_element_type=jnp.float32)      # (N, N)

    # Additive mask: single add replaces att*mask + -1e9*(1-mask).
    s = s + bias_ref[...]

    # Row softmax; reciprocal routed to the EUP slot.
    m = jnp.max(s, axis=-1, keepdims=True)
    e = jnp.exp(s - m)
    denom = jnp.sum(e, axis=-1, keepdims=True)
    p = e * pl.reciprocal(denom, approx=True)

    # out = att @ v  (cross-batch probabilities are exactly 0 after the mask)
    out = jnp.dot(p.astype(jnp.bfloat16), v, preferred_element_type=jnp.float32)
    # Note: c_out < 128 lanes -> partial stores; negligible at these shapes.
    o_ref[...] = out.astype(o_ref.dtype)


def att_forward(x, wq, wk, wv, d):
    """x: (B, T, C_in); wq/wk: (d, C_in); wv: (c_out, C_in) — PyTorch Linear layout."""
    B, T, C_in = x.shape
    c_out = wv.shape[0]

    b_blk = _pick_b_blk(B, T)
    n = b_blk * T                 # rows per grid step
    n_steps = B // b_blk

    # Fused QKV weight (C_in, 2d + c_out); fold 1/sqrt(d) into the q columns.
    scale = 1.0 / (d ** 0.5)
    w_qkv = jnp.concatenate([wq.T * scale, wk.T, wv.T], axis=1).astype(jnp.float32)

    # Block-diagonal causal additive bias over the flattened b_blk*T rows.
    idx = jnp.arange(n)
    same_batch = (idx[:, None] // T) == (idx[None, :] // T)
    causal = idx[None, :] <= idx[:, None]
    bias = jnp.where(same_batch & causal, 0.0, -1e9).astype(jnp.float32)

    xf = x.reshape(B * T, C_in)   # free, contiguous reshape

    kernel = functools.partial(_att_kernel, d=d)

    out_flat = pl.pallas_call(
        kernel,
        out_shape=jax.ShapeDtypeStruct((B * T, c_out), x.dtype),
        grid_spec=pltpu.PrefetchScalarGridSpec(
            num_scalar_prefetch=0,
            grid=(n_steps,),
            in_specs=[
                pl.BlockSpec((n, C_in), lambda g: (g, 0)),
                # Constant index maps: weights / bias fetched once, not per step.
                pl.BlockSpec((C_in, 2 * d + c_out), lambda g: (0, 0)),
                pl.BlockSpec((n, n), lambda g: (0, 0)),
            ],
            out_specs=pl.BlockSpec((n, c_out), lambda g: (g, 0)),
        ),
        compiler_params=pltpu.CompilerParams(
            dimension_semantics=("parallel",),
        ),
    )(xf, w_qkv, bias)

    return out_flat.reshape(B, T, c_out)


def att_reference(x, wq, wk, wv, d):
    """Pure-JAX replica of the PyTorch forward for verification."""
    B, T, _ = x.shape
    q = jnp.einsum("btc,dc->btd", x, wq)
    k = jnp.einsum("btc,dc->btd", x, wk)
    v = jnp.einsum("btc,fc->btf", x, wv)
    att = jnp.einsum("btf,bpf->btp", q, k) / (d ** 0.5)
    mask = jnp.tril(jnp.ones((T, T), dtype=x.dtype))[None]
    att = att * mask + (-1000000000.0) * (1.0 - mask)
    att = jax.nn.softmax(att, axis=-1)
    return jnp.einsum("btp,bpf->btf", att, v)


if __name__ == "__main__":
    # Small shapes consistent with the module: batch=2, seq=8, c_in=32, c_out=16, d=16
    B, T, C_IN, C_OUT, D = 2, 8, 32, 16, 16

    key = jax.random.PRNGKey(0)
    kx, kq, kk, kv = jax.random.split(key, 4)

    x = jax.random.normal(kx, (B, T, C_IN), dtype=jnp.float32)
    # PyTorch Linear weight shape is (out, in), no bias.
    wq = jax.random.normal(kq, (D, C_IN), dtype=jnp.float32) * 0.1
    wk = jax.random.normal(kk, (D, C_IN), dtype=jnp.float32) * 0.1
    wv = jax.random.normal(kv, (C_OUT, C_IN), dtype=jnp.float32) * 0.1

    out = att_forward(x, wq, wk, wv, D)
    out = jax.block_until_ready(out)

    ref = att_reference(x, wq, wk, wv, D)
    assert out.shape == (B, T, C_OUT)
    # bf16 MXU operands (f32 accumulation) + approx reciprocal -> relaxed tolerance.
    assert jnp.allclose(out, ref, atol=2e-2, rtol=2e-2), float(jnp.max(jnp.abs(out - ref)))

    print("KERNEL_OK")
</pallas_src>

<mosaic_0001>
module attributes {stable_mosaic.version = 11 : i64} {
  func.func @_att_kernel(%arg0: i32, %arg1: memref<16x32xf32, #tpu.memory_space<vmem>>, %arg2: memref<32x48xf32, #tpu.memory_space<vmem>>, %arg3: memref<16x16xf32, #tpu.memory_space<vmem>>, %arg4: memref<16x16xf32, #tpu.memory_space<vmem>>) attributes {dimension_semantics = [#tpu.dimension_semantics<parallel>], iteration_bounds = array<i64: 1>, scalar_prefetch = 0 : i64, scratch_operands = 0 : i64, tpu.core_type = #tpu.core_type<tc>, window_params = [{transform_indices = @transform_0, window_bounds = array<i64: 16, 32>}, {pipeline_mode = #tpu.pipeline_mode<synchronous>, transform_indices = @transform_1, window_bounds = array<i64: 32, 48>}, {pipeline_mode = #tpu.pipeline_mode<synchronous>, transform_indices = @transform_2, window_bounds = array<i64: 16, 16>}, {transform_indices = @transform_3, window_bounds = array<i64: 16, 16>}]} {
    %c0 = arith.constant 0 : index
    %c0_0 = arith.constant 0 : index
    %0 = vector.load %arg1[%c0, %c0_0] : memref<16x32xf32, #tpu.memory_space<vmem>>, vector<16x32xf32>
    %1 = arith.truncf %0 : vector<16x32xf32> to vector<16x32xbf16>
    %c0_1 = arith.constant 0 : index
    %c0_2 = arith.constant 0 : index
    %2 = vector.load %arg2[%c0_1, %c0_2] : memref<32x48xf32, #tpu.memory_space<vmem>>, vector<32x48xf32>
    %3 = arith.truncf %2 : vector<32x48xf32> to vector<32x48xbf16>
    %cst = arith.constant dense<0.000000e+00> : vector<16x48xf32>
    %4 = tpu.matmul %1, %3, %cst {dimension_numbers = #tpu.dot_dimension_numbers<[1], [0], [0], [1], [0, 0, 1, 1], [], []>} : vector<16x32xbf16>, vector<32x48xbf16>, vector<16x48xf32> -> vector<16x48xf32>
    %5 = arith.truncf %4 : vector<16x48xf32> to vector<16x48xbf16>
    %6 = vector.extract_strided_slice %5 {offsets = [0, 0], sizes = [16, 16], strides = [1, 1]} : vector<16x48xbf16> to vector<16x16xbf16>
    %7 = vector.extract_strided_slice %5 {offsets = [0, 16], sizes = [16, 16], strides = [1, 1]} : vector<16x48xbf16> to vector<16x16xbf16>
    %8 = vector.extract_strided_slice %5 {offsets = [0, 32], sizes = [16, 16], strides = [1, 1]} : vector<16x48xbf16> to vector<16x16xbf16>
    %cst_3 = arith.constant dense<0.000000e+00> : vector<16x16xf32>
    %9 = tpu.matmul %6, %7, %cst_3 {dimension_numbers = #tpu.dot_dimension_numbers<[1], [1], [0], [0], [0, 0, 1, 0], [], []>} : vector<16x16xbf16>, vector<16x16xbf16>, vector<16x16xf32> -> vector<16x16xf32>
    %c0_4 = arith.constant 0 : index
    %c0_5 = arith.constant 0 : index
    %10 = vector.load %arg3[%c0_4, %c0_5] : memref<16x16xf32, #tpu.memory_space<vmem>>, vector<16x16xf32>
    %11 = arith.addf %9, %10 : vector<16x16xf32>
    %cst_6 = arith.constant dense<0xFF800000> : vector<16xf32>
    %12 = vector.multi_reduction <maximumf>, %11, %cst_6 [1] : vector<16x16xf32> to vector<16xf32>
    %13 = vector.shape_cast %12 : vector<16xf32> to vector<16x1xf32>
    %14 = vector.broadcast %13 : vector<16x1xf32> to vector<16x16xf32>
    %15 = arith.subf %11, %14 : vector<16x16xf32>
    %16 = math.exp %15 : vector<16x16xf32>
    %cst_7 = arith.constant dense<0.000000e+00> : vector<16xf32>
    %17 = vector.multi_reduction <add>, %16, %cst_7 [1] : vector<16x16xf32> to vector<16xf32>
    %18 = vector.shape_cast %17 : vector<16xf32> to vector<16x1xf32>
    %19 = tpu.reciprocal %18 {approx = true} : vector<16x1xf32> -> vector<16x1xf32>
    %20 = vector.broadcast %19 : vector<16x1xf32> to vector<16x16xf32>
    %21 = arith.mulf %16, %20 : vector<16x16xf32>
    %22 = arith.truncf %21 : vector<16x16xf32> to vector<16x16xbf16>
    %cst_8 = arith.constant dense<0.000000e+00> : vector<16x16xf32>
    %23 = tpu.matmul %22, %8, %cst_8 {dimension_numbers = #tpu.dot_dimension_numbers<[1], [0], [0], [1], [0, 0, 1, 1], [], []>} : vector<16x16xbf16>, vector<16x16xbf16>, vector<16x16xf32> -> vector<16x16xf32>
    %c0_9 = arith.constant 0 : index
    %c0_10 = arith.constant 0 : index
    %24 = vector.load %arg4[%c0_9, %c0_10] : memref<16x16xf32, #tpu.memory_space<vmem>>, vector<16x16xf32>
    tpu.vector_store %arg4[%c0_9, %c0_10], %23 {strides = array<i32>} : memref<16x16xf32, #tpu.memory_space<vmem>>, vector<16x16xf32>,
    return
  }
  func.func @transform_0(%arg0: i32) -> (i32, i32) {
    %c0_i32 = arith.constant 0 : i32
    %c0_i32_0 = arith.constant 0 : i32
    return %arg0, %c0_i32 : i32, i32
  }
  func.func @transform_1(%arg0: i32) -> (i32, i32) {
    %c0_i32 = arith.constant 0 : i32
    %c0_i32_0 = arith.constant 0 : i32
    %c0_i32_1 = arith.constant 0 : i32
    return %c0_i32, %c0_i32_0 : i32, i32
  }
  func.func @transform_2(%arg0: i32) -> (i32, i32) {
    %c0_i32 = arith.constant 0 : i32
    %c0_i32_0 = arith.constant 0 : i32
    %c0_i32_1 = arith.constant 0 : i32
    return %c0_i32, %c0_i32_0 : i32, i32
  }
  func.func @transform_3(%arg0: i32) -> (i32, i32) {
    %c0_i32 = arith.constant 0 : i32
    %c0_i32_0 = arith.constant 0 : i32
    return %arg0, %c0_i32 : i32, i32
  }
}

</mosaic_0001>

<llo_original>
// kernel: tpu_custom_call.1
$region0: #{tpu_custom_call.1}
  #allocation0 [shape = 'u32[]', space=smem, size = 0x4, offset = 0x4, fixed_abs, tag = 'smem constant byte address 0x4 - core index']
  #allocation1 [shape = 'u32[144,128]{1,0:T(1,128)}', space=vmem, size = 0x12000, scoped, tag = 'internal scratch']
  %s0 = inlined_call_operand.hbm [shape: f32[16,32], index: 0, kind: input, shape index: {}]
  %s1 = inlined_call_operand.hbm [shape: f32[32,48], index: 1, kind: input, shape index: {}]
  %s2 = inlined_call_operand.hbm [shape: f32[16,16], index: 2, kind: input, shape index: {}]
  %s3 = inlined_call_operand.hbm [shape: f32[16,16], index: 3, kind: output, shape index: {}]
  %s4 = sld [smem:[#allocation0]]
  $region34: #{tpu_custom_call.1} parent=0
    _
  %s6 = ssub.s32 1, %s4
  %s7 = scalar_select 0, %s6, %s4
  $region1: #{tpu_custom_call.1} parent=0
    #allocation2 [shape = 'u8[8192]{0}', space=vmem, size = 0x2000, scoped, tag = 'input window, operand 0, single buffered']
    #allocation3 [shape = 's32[1]{0}', space=sflag, size = 0x4, scoped, tag = 'scoped memory for tpu_custom_call.1']
    #allocation4 [shape = 's32[1]{0}', space=sflag, size = 0x4, scoped, tag = 'scoped memory for tpu_custom_call.1']
    #allocation5 [shape = 'u8[16384]{0}', space=vmem, size = 0x4000, scoped, tag = 'input window, operand 1, single buffered']
    #allocation6 [shape = 's32[1]{0}', space=sflag, size = 0x4, scoped, tag = 'scoped memory for tpu_custom_call.1']
    #allocation7 [shape = 'u8[8192]{0}', space=vmem, size = 0x2000, scoped, tag = 'input window, operand 2, single buffered']
    #allocation8 [shape = 'u8[8192]{0}', space=vmem, size = 0x2000, scoped, tag = 'output window, operand 0, single buffered']
    %8 = vsyncpa [#allocation3], 0
    %9 = vsyncpa [#allocation6], 0
    %10 = vsyncpa [#allocation4], 0
    // Predicated region
    $region2: #{tpu_custom_call.1} parent=1 // pred_check
      _
    $region3: #{tpu_custom_call.1} parent=1 // pred_check_branch
      %12 = sbr.rel (0) target = $region5
    $region4: #{tpu_custom_call.1} parent=1 // pred_region
      %s14 = ssub.s32 256, 256
      %15 = vsyncadd [#allocation3], %s14
      %s16 = sshll.u32 [#allocation2], 4
      %s17 = int_to_ptr.vmem [resolvable:$true] %s16
      %22 = dma.hbm_to_vmem [thread:$0]  %s0, 256, %s17, [#allocation3], 128, 128, 8
    $region5: #{tpu_custom_call.1} parent=1 // pred_fallthru
      _
    // Predicated region
    $region6: #{tpu_custom_call.1} parent=1 // pred_check
      _
    $region7: #{tpu_custom_call.1} parent=1 // pred_check_branch
      %24 = sbr.rel (0) target = $region9
    $region8: #{tpu_custom_call.1} parent=1 // pred_region
      %s26 = ssub.s32 512, 512
      %27 = vsyncadd [#allocation6], %s26
      %s28 = sshll.u32 [#allocation5], 4
      %s29 = int_to_ptr.vmem [resolvable:$true] %s28
      %34 = dma.hbm_to_vmem [thread:$0]  %s1, 512, %s29, [#allocation6], 128, 128, 8
    $region9: #{tpu_custom_call.1} parent=1 // pred_fallthru
      _
    // Predicated region
    $region10: #{tpu_custom_call.1} parent=1 // pred_check
      _
    $region11: #{tpu_custom_call.1} parent=1 // pred_check_branch
      %36 = sbr.rel (0) target = $region13
    $region12: #{tpu_custom_call.1} parent=1 // pred_region
      %s38 = ssub.s32 256, 256
      %39 = vsyncadd [#allocation6], %s38
      %s40 = sshll.u32 [#allocation7], 4
      %s41 = int_to_ptr.vmem [resolvable:$true] %s40
      %46 = dma.hbm_to_vmem [thread:$0]  %s2, 256, %s41, [#allocation6], 128, 128, 8
    $region13: #{tpu_custom_call.1} parent=1 // pred_fallthru
      _
    // Predicated region
    $region14: #{tpu_custom_call.1} parent=1 // pred_check
      _
    $region15: #{tpu_custom_call.1} parent=1 // pred_check_branch
      %48 = sbr.rel (0) target = $region17
    $region16: #{tpu_custom_call.1} parent=1 // pred_region
      %49 = dma.done [#allocation3], 256
    $region17: #{tpu_custom_call.1} parent=1 // pred_fallthru
      _
    // Predicated region
    $region18: #{tpu_custom_call.1} parent=1 // pred_check
      _
    $region19: #{tpu_custom_call.1} parent=1 // pred_check_branch
      %51 = sbr.rel (0) target = $region21
    $region20: #{tpu_custom_call.1} parent=1 // pred_region
      %52 = dma.done [#allocation6], 512
    $region21: #{tpu_custom_call.1} parent=1 // pred_fallthru
      _
    // Predicated region
    $region22: #{tpu_custom_call.1} parent=1 // pred_check
      _
    $region23: #{tpu_custom_call.1} parent=1 // pred_check_branch
      %54 = sbr.rel (0) target = $region25
    $region24: #{tpu_custom_call.1} parent=1 // pred_region
      %55 = dma.done [#allocation6], 256
    $region25: #{tpu_custom_call.1} parent=1 // pred_fallthru
      _
    %v57 = vld [vmem:[#allocation2] sm:$0xff]
    %v58 = vld [vmem:[#allocation2 + $0x8] sm:$0xff]
    %v59 = vpack.c.bf16 %v58, %v57
    %v60 = vld [vmem:[#allocation5] sm:$0xff]
    %v61 = vld [vmem:[#allocation5 + $0x8] sm:$0xff]
    %v62 = vld [vmem:[#allocation5 + $0x10] sm:$0xff]
    %v63 = vld [vmem:[#allocation5 + $0x18] sm:$0xff]
    %v64 = vpack.c.bf16 %v61, %v60
    %v65 = vpack.c.bf16 %v63, %v62
    %vm66 = vcmask 261120
    %v68 = vsel %vm66, %v59, 0
    %70 = vmatprep.subr.bf16.mxu0 0
    %71 = vmatpush1.bf16.msra.mxu0 0
    %72 = vmatprep.subr.bf16.mxu0 0
    %73 = vmatpush1.bf16.msra.mxu0 0
    %74 = vmatprep.subr.bf16.mxu0 0
    %75 = vmatpush1.bf16.msra.mxu0 0
    %76 = vmatprep.subr.bf16.mxu0 0
    %77 = vmatpush1.bf16.msra.mxu0 0
    %78 = vmatprep.subr.bf16.mxu0 0
    %79 = vmatpush1.bf16.msra.mxu0 0
    %80 = vmatprep.subr.bf16.mxu0 0
    %81 = vmatpush1.bf16.msra.mxu0 0
    %82 = vmatprep.subr.bf16.mxu0 0
    %83 = vmatpush1.bf16.msra.mxu0 %v65
    %84 = vmatprep.subr.bf16.mxu0 0
    %85 = vmatpush1.bf16.msra.mxu0 %v64
    %86 = vmatprep.subr.bf16.mxu0 0
    %87 = vmatpush2.bf16.msra.mxu0 0
    %88 = vmatprep.subr.bf16.mxu0 0
    %89 = vmatpush2.bf16.msra.mxu0 0
    %90 = vmatprep.subr.bf16.mxu0 0
    %91 = vmatpush2.bf16.msra.mxu0 0
    %92 = vmatprep.subr.bf16.mxu0 0
    %93 = vmatpush2.bf16.msra.mxu0 0
    %94 = vmatprep.subr.bf16.mxu0 0
    %95 = vmatpush2.bf16.msra.mxu0 0
    %96 = vmatprep.subr.bf16.mxu0 0
    %97 = vmatpush2.bf16.msra.mxu0 0
    %98 = vmatprep.subr.bf16.mxu0 0
    %99 = vmatpush2.bf16.msra.mxu0 0
    %100 = vmatprep.subr.bf16.mxu0 0
    %101 = vmatpush2.bf16.msra.mxu0 0
    %102 = vmatprep.mubr.bf16.mxu0 0
    %103 = vmatmul.mubr.bf16.gmra.mxu0 %v68
    %v104 = vpop.f32.mrf.mxu0
    %v105 = vadd.f32 0.0, %v104
    %v106 = vpop.f32.mrf.mxu0
    %v107 = vpop.f32.mrf.mxu0
    %v108 = vadd.f32 0.0, %v107
    %v109 = vpop.f32.mrf.mxu0
    %110 = vdwg.mxu0
    %v111 = vpack.c.bf16 %v108, %v105
    %v112 = vld [vmem:[#allocation7] sm:$0xff]
    %v113 = vld [vmem:[#allocation7 + $0x8] sm:$0xff]
    %115 = vrot.lane.b32.xlu0 %v111, 112
    %v116 = vpop.permute.xlu0 %115
    %vm117 = vcmask 130048
    %v119 = vsel %vm117, %v111, 0
    %v122 = vsel %vm117, %v116, 0
    %124 = vmatprep.subr.bf16.mxu0 0
    %125 = vmatpush1.bf16.xpose.msra.mxu0 0
    %126 = vmatprep.subr.bf16.mxu0 0
    %127 = vmatpush1.bf16.xpose.msra.mxu0 0
    %128 = vmatprep.subr.bf16.mxu0 0
    %129 = vmatpush1.bf16.xpose.msra.mxu0 0
    %130 = vmatprep.subr.bf16.mxu0 0
    %131 = vmatpush1.bf16.xpose.msra.mxu0 0
    %132 = vmatprep.subr.bf16.mxu0 0
    %133 = vmatpush1.bf16.xpose.msra.mxu0 0
    %134 = vmatprep.subr.bf16.mxu0 0
    %135 = vmatpush1.bf16.xpose.msra.mxu0 0
    %136 = vmatprep.subr.bf16.mxu0 0
    %137 = vmatpush1.bf16.xpose.msra.mxu0 0
    %138 = vmatprep.subr.bf16.mxu0 0
    %139 = vmatpush1.bf16.xpose.msra.mxu0 %v122
    %140 = vmatprep.subr.bf16.mxu0 0
    %141 = vmatpush2.bf16.xpose.msra.mxu0 0
    %142 = vmatprep.subr.bf16.mxu0 0
    %143 = vmatpush2.bf16.xpose.msra.mxu0 0
    %144 = vmatprep.subr.bf16.mxu0 0
    %145 = vmatpush2.bf16.xpose.msra.mxu0 0
    %146 = vmatprep.subr.bf16.mxu0 0
    %147 = vmatpush2.bf16.xpose.msra.mxu0 0
    %148 = vmatprep.subr.bf16.mxu0 0
    %149 = vmatpush2.bf16.xpose.msra.mxu0 0
    %150 = vmatprep.subr.bf16.mxu0 0
    %151 = vmatpush2.bf16.xpose.msra.mxu0 0
    %152 = vmatprep.subr.bf16.mxu0 0
    %153 = vmatpush2.bf16.xpose.msra.mxu0 0
    %154 = vmatprep.subr.bf16.mxu0 0
    %155 = vmatpush2.bf16.xpose.msra.mxu0 0
    %156 = vmatprep.mubr.bf16.mxu0 0
    %157 = vmatmul.mubr.bf16.gmra.mxu0 %v119
    %v158 = vpop.f32.mrf.mxu0
    %v159 = vadd.f32 %v112, %v158
    %v160 = vpop.f32.mrf.mxu0
    %v161 = vpop.f32.mrf.mxu0
    %v162 = vadd.f32 %v113, %v161
    %v163 = vpop.f32.mrf.mxu0
    %164 = vdwg.mxu0
    %v165 = vsel %vm117, %v159, -inf
    %166 = vmax.xlane.f32.xlu0 %v165
    %v167 = vpop.xlane.xlu0 %166
    %v168 = vsel %vm117, %v162, -inf
    %169 = vmax.xlane.f32.xlu0 %v168
    %v170 = vpop.xlane.xlu0 %169
    %v171 = vsub.f32 %v159, %v167
    %v172 = vsub.f32 %v162, %v170
    %v173 = vmul.f32 %v171, 1.442695
    %v174 = vpow.pop %v173
    %v175 = vmul.f32 %v172, 1.442695
    %v176 = vpow.pop %v175
    %v177 = vsel %vm117, %v174, 0.0
    %178 = vadd.xlane.f32.xlu0 %v177
    %v179 = vpop.xlane.xlu0 %178
    %v180 = vsel %vm117, %v176, 0.0
    %181 = vadd.xlane.f32.xlu0 %v180
    %v182 = vpop.xlane.xlu0 %181
    %v183 = vrcp.pop %v179
    %v184 = vrcp.pop %v182
    %v185 = vmul.f32 %v174, %v183
    %v186 = vmul.f32 %v176, %v184
    %v187 = vpack.c.bf16 %v186, %v185
    %188 = vrot.lane.b32.xlu0 %v111, 96
    %v189 = vpop.permute.xlu0 %188
    %v192 = vsel %vm117, %v187, 0
    %194 = vmatprep.subr.bf16.mxu0 0
    %195 = vmatpush1.bf16.msra.mxu0 0
    %196 = vmatprep.subr.bf16.mxu0 0
    %197 = vmatpush1.bf16.msra.mxu0 0
    %198 = vmatprep.subr.bf16.mxu0 0
    %199 = vmatpush1.bf16.msra.mxu0 0
    %200 = vmatprep.subr.bf16.mxu0 0
    %201 = vmatpush1.bf16.msra.mxu0 0
    %202 = vmatprep.subr.bf16.mxu0 0
    %203 = vmatpush1.bf16.msra.mxu0 0
    %204 = vmatprep.subr.bf16.mxu0 0
    %205 = vmatpush1.bf16.msra.mxu0 0
    %206 = vmatprep.subr.bf16.mxu0 0
    %207 = vmatpush1.bf16.msra.mxu0 0
    %208 = vmatprep.subr.bf16.mxu0 0
    %209 = vmatpush1.bf16.msra.mxu0 %v189
    %210 = vmatprep.subr.bf16.mxu0 0
    %211 = vmatpush2.bf16.msra.mxu0 0
    %212 = vmatprep.subr.bf16.mxu0 0
    %213 = vmatpush2.bf16.msra.mxu0 0
    %214 = vmatprep.subr.bf16.mxu0 0
    %215 = vmatpush2.bf16.msra.mxu0 0
    %216 = vmatprep.subr.bf16.mxu0 0
    %217 = vmatpush2.bf16.msra.mxu0 0
    %218 = vmatprep.subr.bf16.mxu0 0
    %219 = vmatpush2.bf16.msra.mxu0 0
    %220 = vmatprep.subr.bf16.mxu0 0
    %221 = vmatpush2.bf16.msra.mxu0 0
    %222 = vmatprep.subr.bf16.mxu0 0
    %223 = vmatpush2.bf16.msra.mxu0 0
    %224 = vmatprep.subr.bf16.mxu0 0
    %225 = vmatpush2.bf16.msra.mxu0 0
    %226 = vmatprep.mubr.bf16.mxu0 0
    %227 = vmatmul.mubr.bf16.gmra.mxu0 %v192
    %v228 = vpop.f32.mrf.mxu0
    %v229 = vadd.f32 0.0, %v228
    %v230 = vpop.f32.mrf.mxu0
    %v231 = vpop.f32.mrf.mxu0
    %v232 = vadd.f32 0.0, %v231
    %v233 = vpop.f32.mrf.mxu0
    %234 = vdwg.mxu0
    %235 = vst.msk [vmem:[#allocation8] sm:$0xff] %vm117, %v229
    %236 = vst.msk [vmem:[#allocation8 + $0x8] sm:$0xff] %vm117, %v232
    // Predicated region
    $region26: #{tpu_custom_call.1} parent=1 // pred_check
      _
    $region27: #{tpu_custom_call.1} parent=1 // pred_check_branch
      %238 = sbr.rel (0) target = $region29
    $region28: #{tpu_custom_call.1} parent=1 // pred_region
      %s240 = ssub.s32 256, 256
      %241 = vsyncadd [#allocation4], %s240
      %s242 = sshll.u32 [#allocation8], 4
      %s243 = int_to_ptr.vmem [resolvable:$true] %s242
      %248 = dma.vmem_to_hbm [thread:$0]  %s243, 256, %s3, [#allocation4], 128, 128, 8
    $region29: #{tpu_custom_call.1} parent=1 // pred_fallthru
      _
    // Predicated region
    $region30: #{tpu_custom_call.1} parent=1 // pred_check
      _
    $region31: #{tpu_custom_call.1} parent=1 // pred_check_branch
      %250 = sbr.rel (0) target = $region33
    $region32: #{tpu_custom_call.1} parent=1 // pred_region
      %251 = dma.done [#allocation4], 256
    $region33: #{tpu_custom_call.1} parent=1 // pred_fallthru
      _
    %252 = vsyncpa [#allocation3], 1
    %253 = vsyncpa [#allocation6], 1
    %254 = vsyncpa [#allocation4], 1

</llo_original>
